<compile_context>
chip_gen: v6e
topology: v6e:2x2x1
jax: 0.10.0
libtpu: 0.0.40
codegen_flags: <defaults>
</compile_context>

<pallas_src>
import numpy as np
import jax
import jax.numpy as jnp
from jax.experimental import pallas as pl
from jax.experimental.pallas import tpu as pltpu


def _roll_kernel(shift_ref, x_ref, o_ref):
    # shift_ref: SMEM int32[1] (scalar-prefetched); x_ref/o_ref: VMEM (TR, W) tile.
    # W is whole per tile, so rotating the tile along lanes == rolling every row.
    # Keep this a single dynamic XLU roll: the kernel is DMA-bound and the XLU
    # occupies a different VLIW slot (rewriting as slice+concat only adds VMEM traffic).
    o_ref[...] = pltpu.roll(x_ref[...], shift=shift_ref[0], axis=1)


def _sublane_multiple(dtype):
    # Packed sublane tile rows: 8 for 4-byte, 16 for 2-byte, 32 for 1-byte dtypes.
    return max(8, 32 // jnp.dtype(dtype).itemsize)


def _pick_row_tile(rows, bytes_per_row, sublane, target_tile_bytes=8 << 20):
    """Largest row tile near target bytes, rounded to the dtype sublane multiple."""
    tr = (target_tile_bytes // max(bytes_per_row, 1)) // sublane * sublane
    tr = max(sublane, tr)
    if tr >= rows:
        return rows  # full-extent block is always legal, any row count
    return tr


def _vmem_capacity_bytes():
    try:
        return int(pltpu.get_tpu_info().vmem_capacity_bytes)
    except Exception:
        return 64 << 20  # conservative fallback: v7x per-TC VMEM


def _row_axis_semantics():
    try:
        kind = jax.devices()[0].device_kind.lower()
    except Exception:
        kind = ""
    if "v7" in kind:
        # v7x: 2 TensorCores per chip; only CORE_PARALLEL actually shards a grid
        # axis across them (plain "parallel" barely changes codegen).
        return (pltpu.CORE_PARALLEL,)
    return ("parallel",)


def random_horizontal_roll(img, key, *, row_tile=None, donate=False,
                           allow_xla_fallback=True):
    """Pallas equivalent of RandomHorizentalRoll.forward (NCHW input).

    Returns (rolled_img, steps) where `steps` is the signed random step drawn
    exactly like torch.randint(-floor(W/2), floor(W/2), (1,)).
    """
    N, C, H, W = img.shape
    low = int(-np.floor(W / 2))
    high = int(np.floor(W / 2))

    # torch.randint(low, high, (1,)).item(); guard W == 1 (empty range) with 0.
    if high <= low:
        steps = jnp.zeros((1,), dtype=jnp.int32)
    else:
        steps = jax.random.randint(key, (1,), low, high, dtype=jnp.int32)
    shift = jnp.mod(steps, W).astype(jnp.int32)  # non-negative, kernel-friendly

    # Flatten to (rows, W): W stays on the lane axis, rows become the streaming axis.
    rows = N * C * H
    x2 = img.reshape(rows, W)

    itemsize = jnp.dtype(img.dtype).itemsize
    bytes_per_row = W * itemsize
    sublane = _sublane_multiple(img.dtype)

    if row_tile is None:
        tr = _pick_row_tile(rows, bytes_per_row, sublane)
        if allow_xla_fallback and pl.cdiv(rows, tr) < 4:
            # Too few grid steps to pipeline: fixed pallas_call overhead dominates;
            # XLA's fused dynamic-slice roll wins on tiny tensors.
            return jnp.roll(img, steps[0], axis=-1), steps
    else:
        tr = min(row_tile, rows)

    grid = (pl.cdiv(rows, tr),)
    tile_bytes = tr * bytes_per_row

    # VMEM budget: 2 double-buffered tiles each for input and output + headroom,
    # clamped to 75% of this generation's physical VMEM (v7x: 64 MiB, v5e/v6e: 128 MiB),
    # and never below 32 MiB so v5e's 16 MiB default doesn't shrink the pipeline.
    vmem_limit = int(min(max(4 * tile_bytes + (4 << 20), 32 << 20),
                         (_vmem_capacity_bytes() * 3) // 4))

    grid_spec = pltpu.PrefetchScalarGridSpec(
        num_scalar_prefetch=1,
        grid=grid,
        in_specs=[pl.BlockSpec((tr, W), lambda i, s_ref: (i, 0))],
        out_specs=pl.BlockSpec((tr, W), lambda i, s_ref: (i, 0)),
    )

    # Pure bandwidth op: read + write the whole image once.
    cost = pl.CostEstimate(flops=0, transcendentals=0,
                           bytes_accessed=2 * rows * W * itemsize)

    # Optional donate path: alias the image buffer into the output (halves HBM
    # footprint when the caller donates it).  Safe in-place: every output block
    # maps to the same block index as its input block.
    aliases = {1: 0} if donate else {}

    def _call(dim_sems):
        return pl.pallas_call(
            _roll_kernel,
            out_shape=jax.ShapeDtypeStruct((rows, W), img.dtype),
            grid_spec=grid_spec,
            compiler_params=pltpu.CompilerParams(
                dimension_semantics=dim_sems,
                vmem_limit_bytes=vmem_limit,
            ),
            cost_estimate=cost,
            input_output_aliases=aliases,
        )(shift, x2)

    dim_sems = _row_axis_semantics()
    try:
        out2 = _call(dim_sems)
    except Exception:
        if dim_sems == ("parallel",):
            raise
        out2 = _call(("parallel",))  # safety net if CORE_PARALLEL is rejected

    return out2.reshape(N, C, H, W), steps


if __name__ == "__main__":
    root = jax.random.PRNGKey(0)
    k1, k2, k3, k4 = jax.random.split(root, 4)

    # Test 1: NCHW f32, lane-dense W=128, 4 pipelined grid steps (row_tile=16).
    img1 = jax.random.normal(k1, (2, 4, 8, 128), dtype=jnp.float32)
    out1, steps1 = random_horizontal_roll(img1, k2, row_tile=16)
    out1 = jax.block_until_ready(out1)
    ref1 = jnp.roll(img1, int(steps1[0]), axis=-1)
    np.testing.assert_array_equal(np.asarray(out1), np.asarray(ref1))

    # Test 2: W=256 (dynamic roll spanning two 128-lane groups) plus a partial
    # last row tile (rows=20, row_tile=8 -> grid=3, masked writeback on the tail).
    img2 = jax.random.normal(k3, (1, 2, 10, 256), dtype=jnp.float32)
    out2, steps2 = random_horizontal_roll(img2, k4, row_tile=8)
    out2 = jax.block_until_ready(out2)
    ref2 = jnp.roll(img2, int(steps2[0]), axis=-1)
    np.testing.assert_array_equal(np.asarray(out2), np.asarray(ref2))

    print("KERNEL_OK")
</pallas_src>

<mosaic_0001>
module attributes {stable_mosaic.version = 11 : i64} {
  func.func @_roll_kernel(%arg0: i32, %arg1: memref<1xi32, #tpu.memory_space<smem>>, %arg2: memref<16x128xf32, #tpu.memory_space<vmem>>, %arg3: memref<16x128xf32, #tpu.memory_space<vmem>>) attributes {dimension_semantics = [#tpu.dimension_semantics<parallel>], iteration_bounds = array<i64: 4>, scalar_prefetch = 1 : i64, scratch_operands = 0 : i64, tpu.core_type = #tpu.core_type<tc>, window_params = [{transform_indices = @transform_0, window_bounds = array<i64: 16, 128>}, {transform_indices = @transform_1, window_bounds = array<i64: 16, 128>}]} {
    %c0 = arith.constant 0 : index
    %c0_0 = arith.constant 0 : index
    %0 = vector.load %arg2[%c0, %c0_0] : memref<16x128xf32, #tpu.memory_space<vmem>>, vector<16x128xf32>
    %c0_1 = arith.constant 0 : index
    %1 = memref.load %arg1[%c0_1] : memref<1xi32, #tpu.memory_space<smem>>
    %2 = tpu.dynamic_rotate %0 by %1 dim 1 : vector<16x128xf32>, i32 -> vector<16x128xf32>
    %c0_2 = arith.constant 0 : index
    %c0_3 = arith.constant 0 : index
    %3 = vector.load %arg3[%c0_2, %c0_3] : memref<16x128xf32, #tpu.memory_space<vmem>>, vector<16x128xf32>
    tpu.vector_store %arg3[%c0_2, %c0_3], %2 {strides = array<i32>} : memref<16x128xf32, #tpu.memory_space<vmem>>, vector<16x128xf32>,
    return
  }
  func.func @transform_0(%arg0: i32, %arg1: memref<1xi32, #tpu.memory_space<smem>>) -> (i32, i32) {
    %c0_i32 = arith.constant 0 : i32
    %c0_i32_0 = arith.constant 0 : i32
    return %arg0, %c0_i32 : i32, i32
  }
  func.func @transform_1(%arg0: i32, %arg1: memref<1xi32, #tpu.memory_space<smem>>) -> (i32, i32) {
    %c0_i32 = arith.constant 0 : i32
    %c0_i32_0 = arith.constant 0 : i32
    return %arg0, %c0_i32 : i32, i32
  }
}

</mosaic_0001>

<llo_original>
// kernel: tpu_custom_call.1
$region0: #{tpu_custom_call.1}
  #allocation0 [shape = 'u32[]', space=smem, size = 0x4, offset = 0x4, fixed_abs, tag = 'smem constant byte address 0x4 - core index']
  #allocation1 [shape = 'u32[144,128]{1,0:T(1,128)}', space=vmem, size = 0x12000, scoped, tag = 'internal scratch']
  #allocation2 [shape = 's32[1]{0}', space=sflag, size = 0x4, scoped, tag = 'scoped memory for tpu_custom_call.1']
  #allocation3 [shape = 's32[1]{0:T(128)S(6)}', space=smem, size = 0x200, scoped, tag = 'prefetched SMEM operand 0']
  %s0 = inlined_call_operand.<no memory space> [shape: s32[1], index: 0, kind: input, shape index: {}]
  %s1 = inlined_call_operand.hbm [shape: f32[64,128], index: 1, kind: input, shape index: {}]
  %s2 = inlined_call_operand.hbm [shape: f32[64,128], index: 2, kind: output, shape index: {}]
  %s3 = sld [smem:[#allocation0]]
  $region41: #{tpu_custom_call.1} parent=0
    _
  %s5 = ssub.s32 1, %s3
  %s6 = scalar_select 0, %s5, %s3
  %7 = sst [smem:[#allocation3]] %s0
  $region1: #{tpu_custom_call.1} parent=0
    #allocation4 [shape = 'u8[16384]{0}', space=vmem, size = 0x4000, scoped, tag = 'input window, operand 1']
    #allocation5 [shape = 's32[2]{0}', space=sflag, size = 0x8, scoped, tag = 'scoped memory for tpu_custom_call.1']
    #allocation6 [shape = 's32[2]{0}', space=sflag, size = 0x8, scoped, tag = 'scoped memory for tpu_custom_call.1']
    #allocation7 [shape = 'u8[16384]{0}', space=vmem, size = 0x4000, scoped, tag = 'output window, operand 0']
    %8 = vsyncpa [#allocation5], 0
    %s9 = scalar_lea.sflag [#allocation5], 1
    %10 = vsyncpa %s9, 0
    %11 = vsyncpa [#allocation6], 0
    %s12 = scalar_lea.sflag [#allocation6], 1
    %13 = vsyncpa %s12, 0
    loop: start=0, step=1, limit=6
    $region2: #{tpu_custom_call.1} parent=1 // loop_pre_header
      _
    $region3: #{tpu_custom_call.1} parent=1 // loop_header
      %s15 = sphi 0, %s19
      %p16 = scmp.ge.s32.totalorder %s15, 6
      %s25 = sphi 0, %s27
      %s28 = sphi 0, %s25
      %s29 = sphi 0, %s28
      %s45 = sphi 0, %s29
      %s51 = sphi 0, %s53
      %s54 = sphi 0, %s51
      %s55 = sphi 0, %s54
      %s71 = sphi 0, %s55
    $region4: #{tpu_custom_call.1} parent=1 // loop_header_branch
      %18 = sbr.rel (%p16) target = $region8
    $region5: #{tpu_custom_call.1} parent=1 // loop_body
      %s20 = ssub.s32 %s15, 1
      %s21 = ssub.s32 %s15, 2
      %s22 = sadd.s32 %s15, 1
      %s23 = ssub.s32 %s15, %s22
      %p24 = scmp.eq.s32.totalorder %s23, 0
      %s26 = sadd.s32 %s25, 1
      %s27 = scalar_select %p24, %s25, %s26
      %p30 = pneg %p24
      %p31 = scmp.eq.s32.totalorder %s15, 3
      %p32 = por %p30, %p31
      %p33 = scmp.ne.s32.totalorder %s25, %s28
      %p34 = scmp.eq.s32.totalorder %s15, 0
      %p35 = por %p33, %p34
      %p36 = scmp.ne.s32.totalorder %s25, %s28
      %p37 = scmp.eq.s32.totalorder %s20, 3
      %p38 = por %p36, %p37
      %p39 = scmp.ne.s32.totalorder %s28, %s29
      %p40 = scmp.eq.s32.totalorder %s20, 0
      %p41 = por %p39, %p40
      %p42 = scmp.ne.s32.totalorder %s28, %s29
      %p43 = scmp.eq.s32.totalorder %s21, 3
      %p44 = por %p42, %p43
      %p46 = scmp.ne.s32.totalorder %s29, %s45
      %p47 = scmp.eq.s32.totalorder %s21, 0
      %p48 = por %p46, %p47
      %s49 = ssub.s32 %s15, %s22
      %p50 = scmp.eq.s32.totalorder %s49, 0
      %s52 = sadd.s32 %s51, 1
      %s53 = scalar_select %p50, %s51, %s52
      %p56 = pneg %p50
      %p57 = scmp.eq.s32.totalorder %s15, 3
      %p58 = por %p56, %p57
      %p59 = scmp.ne.s32.totalorder %s51, %s54
      %p60 = scmp.eq.s32.totalorder %s15, 0
      %p61 = por %p59, %p60
      %p62 = scmp.ne.s32.totalorder %s51, %s54
      %p63 = scmp.eq.s32.totalorder %s20, 3
      %p64 = por %p62, %p63
      %p65 = scmp.ne.s32.totalorder %s54, %s55
      %p66 = scmp.eq.s32.totalorder %s20, 0
      %p67 = por %p65, %p66
      %p68 = scmp.ne.s32.totalorder %s54, %s55
      %p69 = scmp.eq.s32.totalorder %s21, 3
      %p70 = por %p68, %p69
      %p72 = scmp.ne.s32.totalorder %s55, %s71
      %p73 = scmp.eq.s32.totalorder %s21, 0
      %p74 = por %p72, %p73
      %p75 = scmp.le.s32.totalorder 1, %s15
      %p76 = scmp.lt.s32.totalorder %s15, 5
      %p77 = pnand %p75, %p76
      %p78 = pneg %p77
      // Predicated region
      $region9: #{tpu_custom_call.1} parent=5 // pred_check
        _
      $region10: #{tpu_custom_call.1} parent=5 // pred_check_branch
        %80 = sbr.rel (%p77) target = $region12
      $region11: #{tpu_custom_call.1} parent=5 // pred_region
        %s81 = ssub.s32 %s15, 1
      $region12: #{tpu_custom_call.1} parent=5 // pred_fallthru
        _
      %p82 = scmp.lt.s32.totalorder %s15, 4
      // Predicated region
      $region13: #{tpu_custom_call.1} parent=5 // pred_check
        %p83 = pneg %p82
      $region14: #{tpu_custom_call.1} parent=5 // pred_check_branch
        %85 = sbr.rel (%p83) target = $region16
      $region15: #{tpu_custom_call.1} parent=5 // pred_region
        // Predicated region
        $region17: #{tpu_custom_call.1} parent=15 // pred_check
          %p86 = pneg %p35
        $region18: #{tpu_custom_call.1} parent=15 // pred_check_branch
          %88 = sbr.rel (%p86) target = $region20
        $region19: #{tpu_custom_call.1} parent=15 // pred_region
          %s89 = sand.u32 %s25, 1
          %s90 = scalar_lea.sflag [#allocation5], %s89
          %s91 = sand.u32 %s25, 1
          %s92 = smul.addr %s91, 16
          %s93 = scalar_lea.vmem [#allocation4], %s92
          %s94 = smul.u32 2, %s15
          %s96 = ssub.s32 256, 256
          %97 = vsyncadd %s90, %s96
          %s98 = smul.addr %s94, 128
          %s99 = scalar_lea.hbm %s1, %s98
          %s100 = sshll.u32 %s93, 4
          %s101 = int_to_ptr.vmem [resolvable:$true] %s100
          %106 = dma.hbm_to_vmem [thread:$0]  %s99, 256, %s101, %s90, 128, 128, 8
        $region20: #{tpu_custom_call.1} parent=15 // pred_fallthru
          _
      $region16: #{tpu_custom_call.1} parent=5 // pred_fallthru
        _
      %p107 = scmp.le.s32.totalorder 1, %s15
      %p108 = scmp.lt.s32.totalorder %s15, 5
      %p109 = pnand %p107, %p108
      %p110 = pneg %p109
      // Predicated region
      $region21: #{tpu_custom_call.1} parent=5 // pred_check
        _
      $region22: #{tpu_custom_call.1} parent=5 // pred_check_branch
        %112 = sbr.rel (%p109) target = $region24
      $region23: #{tpu_custom_call.1} parent=5 // pred_region
        %s113 = ssub.s32 %s15, 1
        %s114 = sand.u32 %s28, 1
        %s115 = scalar_lea.sflag [#allocation5], %s114
        %s116 = sand.u32 %s28, 1
        %s117 = smul.addr %s116, 16
        %s118 = scalar_lea.vmem [#allocation4], %s117
        // Predicated region
        $region25: #{tpu_custom_call.1} parent=23 // pred_check
          %p119 = pneg %p41
        $region26: #{tpu_custom_call.1} parent=23 // pred_check_branch
          %121 = sbr.rel (%p119) target = $region28
        $region27: #{tpu_custom_call.1} parent=23 // pred_region
          %122 = dma.done %s115, 256
        $region28: #{tpu_custom_call.1} parent=23 // pred_fallthru
          _
        %s123 = sand.u32 %s28, 1
        %s124 = scalar_lea.sflag [#allocation5], %s123
        %s125 = sand.u32 %s28, 1
        %s126 = smul.addr %s125, 16
        %s127 = scalar_lea.vmem [#allocation4], %s126
        %p128 = pneg %p41
        %p129 = pneg %p38
        %p130 = pneg %p67
        %p131 = pneg %p64
        %s132 = sand.u32 %s54, 1
        %s133 = scalar_lea.sflag [#allocation6], %s132
        %s134 = sand.u32 %s54, 1
        %s135 = smul.addr %s134, 16
        %s136 = scalar_lea.vmem [#allocation7], %s135
        %s137 = smul.u32 2, %s20
        %s138 = smul.u32 2, %s20
        %v139 = vld [vmem:[%s118] sm:$0xff]
        %v140 = vld [vmem:[%s118 + $0x8] sm:$0xff]
        %s141 = sld [smem:[#allocation3]]
        %s142 = sand.u32 %s141, 127
        %s143 = sand.u32 %s142, 127
        %144 = vrot.lane.b32.xlu0 %v139, %s143
        %v145 = vpop.permute.xlu0 %144
        %146 = vrot.lane.b32.xlu0 %v140, %s143
        %v147 = vpop.permute.xlu0 %146
        %148 = vst [vmem:[%s136] sm:$0xff] %v145
        %149 = vst [vmem:[%s136 + $0x8] sm:$0xff] %v147
        %s150 = sand.u32 %s54, 1
        %s151 = scalar_lea.sflag [#allocation6], %s150
        %s152 = sand.u32 %s54, 1
        %s153 = smul.addr %s152, 16
        %s154 = scalar_lea.vmem [#allocation7], %s153
        // Predicated region
        $region29: #{tpu_custom_call.1} parent=23 // pred_check
          %p155 = pneg %p64
        $region30: #{tpu_custom_call.1} parent=23 // pred_check_branch
          %157 = sbr.rel (%p155) target = $region32
        $region31: #{tpu_custom_call.1} parent=23 // pred_region
          %s158 = smul.u32 2, %s20
          %s160 = ssub.s32 256, 256
          %161 = vsyncadd %s151, %s160
          %s162 = smul.addr %s158, 128
          %s163 = scalar_lea.hbm %s2, %s162
          %s164 = sshll.u32 %s154, 4
          %s165 = int_to_ptr.vmem [resolvable:$true] %s164
          %170 = dma.vmem_to_hbm [thread:$0]  %s165, 256, %s163, %s151, 128, 128, 8
        $region32: #{tpu_custom_call.1} parent=23 // pred_fallthru
          _
      $region24: #{tpu_custom_call.1} parent=5 // pred_fallthru
        _
      %p171 = scmp.le.s32.totalorder 2, %s15
      // Predicated region
      $region33: #{tpu_custom_call.1} parent=5 // pred_check
        %p172 = pneg %p171
      $region34: #{tpu_custom_call.1} parent=5 // pred_check_branch
        %174 = sbr.rel (%p172) target = $region36
      $region35: #{tpu_custom_call.1} parent=5 // pred_region
        %s175 = ssub.s32 %s15, 2
        // Predicated region
        $region37: #{tpu_custom_call.1} parent=35 // pred_check
          %p176 = pneg %p70
        $region38: #{tpu_custom_call.1} parent=35 // pred_check_branch
          %178 = sbr.rel (%p176) target = $region40
        $region39: #{tpu_custom_call.1} parent=35 // pred_region
          %s179 = sand.u32 %s55, 1
          %s180 = scalar_lea.sflag [#allocation6], %s179
          %s181 = sand.u32 %s55, 1
          %s182 = smul.addr %s181, 16
          %s183 = scalar_lea.vmem [#allocation7], %s182
          %184 = dma.done %s180, 256
        $region40: #{tpu_custom_call.1} parent=35 // pred_fallthru
          _
      $region36: #{tpu_custom_call.1} parent=5 // pred_fallthru
        _
    $region6: #{tpu_custom_call.1} parent=1 // loop_footer
      %s19 = sadd.s32 1, %s15
    $region7: #{tpu_custom_call.1} parent=1 // loop_footer_branch
      %14 = sbr.rel target = $region3
    $region8: #{tpu_custom_call.1} parent=1 // loop_exit
      _
    %185 = vsyncpa [#allocation5], 1
    %s186 = scalar_lea.sflag [#allocation5], 1
    %187 = vsyncpa %s186, 1
    %188 = vsyncpa [#allocation6], 1
    %s189 = scalar_lea.sflag [#allocation6], 1
    %190 = vsyncpa %s189, 1

</llo_original>
